<compile_context>
chip_gen: v7x
topology: tpu7x:2x2x1
jax: 0.10.0
libtpu: 0.0.40
codegen_flags: <defaults>
</compile_context>

<pallas_src>
import functools

import jax
import jax.numpy as jnp
from jax.experimental import pallas as pl
from jax.experimental.pallas import tpu as pltpu

EPS = 1e-5

# ~2 MiB of f32 per pipelined buffer is the measured sweet spot for
# memory-bound elementwise work (85%+ of HBM roofline) while staying far
# below the default scoped-VMEM limit on every TPU generation.
_PER_BUFFER_F32_ELEMS = (2 * 1024 * 1024) // 4
_MAX_BLOCK_ROWS = 1024


def _ln_kernel_nobias(x_ref, w_ref, o_ref):
    # x_ref: (TM, D), w_ref: (1, D), o_ref: (TM, D)
    x = x_ref[...].astype(jnp.float32)
    d = x.shape[-1]
    inv_d = 1.0 / d
    s1 = jnp.sum(x, axis=-1, keepdims=True)
    s2 = jnp.sum(x * x, axis=-1, keepdims=True)
    mean = s1 * inv_d
    var = s2 * inv_d - mean * mean
    inv = jax.lax.rsqrt(var + EPS)
    y = (x - mean) * inv * w_ref[...].astype(jnp.float32)
    o_ref[...] = y.astype(o_ref.dtype)


def _ln_kernel_bias(x_ref, w_ref, b_ref, o_ref):
    # x_ref: (TM, D), w_ref/b_ref: (1, D), o_ref: (TM, D)
    x = x_ref[...].astype(jnp.float32)
    d = x.shape[-1]
    inv_d = 1.0 / d
    s1 = jnp.sum(x, axis=-1, keepdims=True)
    s2 = jnp.sum(x * x, axis=-1, keepdims=True)
    mean = s1 * inv_d
    var = s2 * inv_d - mean * mean
    inv = jax.lax.rsqrt(var + EPS)
    y = (x - mean) * inv * w_ref[...].astype(jnp.float32)
    y = y + b_ref[...].astype(jnp.float32)
    o_ref[...] = y.astype(o_ref.dtype)


def _pick_block_rows(rows, d):
    """Row tile: ~2 MiB per f32 buffer, multiple of 8 sublanes, <= 1024."""
    tm = max(8, min(_MAX_BLOCK_ROWS, _PER_BUFFER_F32_ELEMS // max(d, 1)))
    tm = (tm // 8) * 8
    if rows <= tm:
        return rows  # full-extent block along rows is always legal
    return tm


@jax.jit
def layer_norm(x, weight, bias=None):
    """LayerNorm over the last dim of x. Matches F.layer_norm(x, (D,), w, b, 1e-5)."""
    orig_shape = x.shape
    d = orig_shape[-1]
    x2 = x.reshape(-1, d)
    rows = x2.shape[0]

    tm = _pick_block_rows(rows, d)
    grid = (pl.cdiv(rows, tm),)  # partial last block handled by Pallas (masked writes)

    itemsize = jnp.dtype(x.dtype).itemsize
    cost = pl.CostEstimate(
        flops=5 * rows * d,
        transcendentals=rows,
        bytes_accessed=(2 * rows * d + 2 * d) * itemsize,
    )
    cparams = pltpu.CompilerParams(
        dimension_semantics=("parallel",),   # lets v7x shard rows over both TCs
        vmem_limit_bytes=32 * 1024 * 1024,   # headroom on v5e, no-op elsewhere
    )

    w2 = weight.reshape(1, d)

    if bias is None:
        out = pl.pallas_call(
            _ln_kernel_nobias,
            out_shape=jax.ShapeDtypeStruct((rows, d), x.dtype),
            grid_spec=pltpu.PrefetchScalarGridSpec(
                num_scalar_prefetch=0,
                grid=grid,
                in_specs=[
                    pl.BlockSpec((tm, d), lambda i: (i, 0)),
                    pl.BlockSpec((1, d), lambda i: (0, 0)),
                ],
                out_specs=pl.BlockSpec((tm, d), lambda i: (i, 0)),
            ),
            compiler_params=cparams,
            cost_estimate=cost,
        )(x2, w2)
    else:
        b2 = bias.reshape(1, d)
        out = pl.pallas_call(
            _ln_kernel_bias,
            out_shape=jax.ShapeDtypeStruct((rows, d), x.dtype),
            grid_spec=pltpu.PrefetchScalarGridSpec(
                num_scalar_prefetch=0,
                grid=grid,
                in_specs=[
                    pl.BlockSpec((tm, d), lambda i: (i, 0)),
                    pl.BlockSpec((1, d), lambda i: (0, 0)),
                    pl.BlockSpec((1, d), lambda i: (0, 0)),
                ],
                out_specs=pl.BlockSpec((tm, d), lambda i: (i, 0)),
            ),
            compiler_params=cparams,
            cost_estimate=cost,
        )(x2, w2, b2)

    return out.reshape(orig_shape)


if __name__ == "__main__":
    key = jax.random.PRNGKey(0)
    B, S, D = 2, 8, 32
    x = jax.random.normal(key, (B, S, D), dtype=jnp.float32)

    # deterministic params, matching nn.Parameter(torch.ones(ndim)); module default bias=False
    weight = jnp.ones((D,), dtype=jnp.float32)

    # ---- no-bias path (module default) ----
    y = layer_norm(x, weight, None)
    jax.block_until_ready(y)

    mean = jnp.mean(x, axis=-1, keepdims=True)
    var = jnp.mean((x - mean) ** 2, axis=-1, keepdims=True)
    ref = (x - mean) * jax.lax.rsqrt(var + EPS) * weight
    assert jnp.allclose(y, ref, atol=1e-5, rtol=1e-5), "mismatch vs reference (no bias)"

    # ---- bias path (bias=True construction) ----
    bias = 0.1 * jnp.arange(D, dtype=jnp.float32)
    yb = layer_norm(x, weight, bias)
    jax.block_until_ready(yb)
    refb = ref + bias
    assert jnp.allclose(yb, refb, atol=1e-5, rtol=1e-5), "mismatch vs reference (bias)"

    print("KERNEL_OK")
</pallas_src>

<mosaic_0001>
module attributes {stable_mosaic.version = 11 : i64} {
  func.func @_ln_kernel_nobias(%arg0: i32, %arg1: memref<16x32xf32, #tpu.memory_space<vmem>>, %arg2: memref<1x32xf32, #tpu.memory_space<vmem>>, %arg3: memref<16x32xf32, #tpu.memory_space<vmem>>) attributes {dimension_semantics = [#tpu.dimension_semantics<parallel>], iteration_bounds = array<i64: 1>, scalar_prefetch = 0 : i64, scratch_operands = 0 : i64, tpu.core_type = #tpu.core_type<tc>, window_params = [{transform_indices = @transform_0, window_bounds = array<i64: 16, 32>}, {pipeline_mode = #tpu.pipeline_mode<synchronous>, transform_indices = @transform_1, window_bounds = array<i64: 1, 32>}, {transform_indices = @transform_2, window_bounds = array<i64: 16, 32>}]} {
    %c0 = arith.constant 0 : index
    %c0_0 = arith.constant 0 : index
    %0 = vector.load %arg1[%c0, %c0_0] : memref<16x32xf32, #tpu.memory_space<vmem>>, vector<16x32xf32>
    %cst = arith.constant dense<0.000000e+00> : vector<16xf32>
    %1 = vector.multi_reduction <add>, %0, %cst [1] : vector<16x32xf32> to vector<16xf32>
    %2 = vector.shape_cast %1 : vector<16xf32> to vector<16x1xf32>
    %3 = arith.mulf %0, %0 : vector<16x32xf32>
    %cst_1 = arith.constant dense<0.000000e+00> : vector<16xf32>
    %4 = vector.multi_reduction <add>, %3, %cst_1 [1] : vector<16x32xf32> to vector<16xf32>
    %5 = vector.shape_cast %4 : vector<16xf32> to vector<16x1xf32>
    %cst_2 = arith.constant 3.125000e-02 : f32
    %6 = vector.broadcast %cst_2 : f32 to vector<16x1xf32>
    %7 = arith.mulf %2, %6 : vector<16x1xf32>
    %cst_3 = arith.constant 3.125000e-02 : f32
    %8 = vector.broadcast %cst_3 : f32 to vector<16x1xf32>
    %9 = arith.mulf %5, %8 : vector<16x1xf32>
    %10 = arith.mulf %7, %7 : vector<16x1xf32>
    %11 = arith.subf %9, %10 : vector<16x1xf32>
    %cst_4 = arith.constant 9.99999974E-6 : f32
    %12 = vector.broadcast %cst_4 : f32 to vector<16x1xf32>
    %13 = arith.addf %11, %12 : vector<16x1xf32>
    %14 = math.rsqrt %13 : vector<16x1xf32>
    %15 = vector.broadcast %7 : vector<16x1xf32> to vector<16x32xf32>
    %16 = arith.subf %0, %15 : vector<16x32xf32>
    %17 = vector.broadcast %14 : vector<16x1xf32> to vector<16x32xf32>
    %18 = arith.mulf %16, %17 : vector<16x32xf32>
    %c0_5 = arith.constant 0 : index
    %c0_6 = arith.constant 0 : index
    %19 = vector.load %arg2[%c0_5, %c0_6] : memref<1x32xf32, #tpu.memory_space<vmem>>, vector<1x32xf32>
    %20 = vector.broadcast %19 : vector<1x32xf32> to vector<16x32xf32>
    %21 = arith.mulf %18, %20 : vector<16x32xf32>
    %c0_7 = arith.constant 0 : index
    %c0_8 = arith.constant 0 : index
    %22 = vector.load %arg3[%c0_7, %c0_8] : memref<16x32xf32, #tpu.memory_space<vmem>>, vector<16x32xf32>
    tpu.vector_store %arg3[%c0_7, %c0_8], %21 {strides = array<i32>} : memref<16x32xf32, #tpu.memory_space<vmem>>, vector<16x32xf32>,
    return
  }
  func.func @transform_0(%arg0: i32) -> (i32, i32) {
    %c0_i32 = arith.constant 0 : i32
    %c0_i32_0 = arith.constant 0 : i32
    return %arg0, %c0_i32 : i32, i32
  }
  func.func @transform_1(%arg0: i32) -> (i32, i32) {
    %c0_i32 = arith.constant 0 : i32
    %c0_i32_0 = arith.constant 0 : i32
    %c0_i32_1 = arith.constant 0 : i32
    return %c0_i32, %c0_i32_0 : i32, i32
  }
  func.func @transform_2(%arg0: i32) -> (i32, i32) {
    %c0_i32 = arith.constant 0 : i32
    %c0_i32_0 = arith.constant 0 : i32
    return %arg0, %c0_i32 : i32, i32
  }
}

</mosaic_0001>

<llo_original>
// kernel: layer_norm.1
$region0: #{layer_norm.1}
  #allocation0 [shape = 'u32[]', space=smem, size = 0x4, offset = 0x4, fixed_abs, tag = 'smem constant byte address 0x4 - core index']
  #allocation1 [shape = 'u32[144,128]{1,0:T(1,128)}', space=vmem, size = 0x12000, scoped, tag = 'internal scratch']
  %s0 = inlined_call_operand.hbm [shape: f32[16,32], index: 0, kind: input, shape index: {}]
  %s1 = inlined_call_operand.vmem [shape: f32[1,32], index: 1, kind: input, shape index: {}]
  %s2 = inlined_call_operand.hbm [shape: f32[16,32], index: 2, kind: output, shape index: {}]
  %s3 = sld [smem:[#allocation0]]
  $region22: #{layer_norm.1} parent=0
    _
  %s5 = ssub.s32 1, %s3
  %s6 = scalar_select 0, %s5, %s3
  $region1: #{layer_norm.1} parent=0
    #allocation2 [shape = 'u8[8192]{0}', space=vmem, size = 0x2000, scoped, tag = 'input window, operand 0, single buffered']
    #allocation3 [shape = 's32[1]{0}', space=sflag, size = 0x4, scoped, tag = 'scoped memory for layer_norm.1']
    #allocation4 [shape = 's32[1]{0}', space=sflag, size = 0x4, scoped, tag = 'scoped memory for layer_norm.1']
    #allocation5 [shape = 'u8[8192]{0}', space=vmem, size = 0x2000, scoped, tag = 'output window, operand 0, single buffered']
    %7 = vsyncpa [#allocation3], 0
    %8 = vsyncpa [#allocation4], 0
    // Predicated region
    $region2: #{layer_norm.1} parent=1 // pred_check
      _
    $region3: #{layer_norm.1} parent=1 // pred_check_branch
      %10 = sbr.rel (0) target = $region5
    $region4: #{layer_norm.1} parent=1 // pred_region
      %s12 = ssub.s32 256, 256
      %13 = vsyncadd [#allocation3], %s12
      %s14 = sshll.u32 [#allocation2], 4
      %s15 = int_to_ptr.vmem [resolvable:$true] %s14
      %20 = dma.hbm_to_vmem [thread:$0]  %s0, 256, %s15, [#allocation3], 128, 128, 8
    $region5: #{layer_norm.1} parent=1 // pred_fallthru
      _
    // Predicated region
    $region6: #{layer_norm.1} parent=1 // pred_check
      _
    $region7: #{layer_norm.1} parent=1 // pred_check_branch
      %22 = sbr.rel (0) target = $region9
    $region8: #{layer_norm.1} parent=1 // pred_region
      _
    $region9: #{layer_norm.1} parent=1 // pred_fallthru
      _
    // Predicated region
    $region10: #{layer_norm.1} parent=1 // pred_check
      _
    $region11: #{layer_norm.1} parent=1 // pred_check_branch
      %24 = sbr.rel (0) target = $region13
    $region12: #{layer_norm.1} parent=1 // pred_region
      %25 = dma.done [#allocation3], 256
    $region13: #{layer_norm.1} parent=1 // pred_fallthru
      _
    %v26 = vld [vmem:[#allocation2] sm:$0xff]
    %v27 = vld [vmem:[#allocation2 + $0x8] sm:$0xff]
    %vm28 = vcmask 261120
    %v29 = vsel %vm28, %v26, 0.0
    %30 = vadd.xlane.f32.xlu0 %v29
    %v31 = vpop.xlane.xlu0 %30
    %v32 = vsel %vm28, %v27, 0.0
    %33 = vadd.xlane.f32.xlu0 %v32
    %v34 = vpop.xlane.xlu0 %33
    %v35 = vmul.f32 %v26, %v26
    %v36 = vmul.f32 %v27, %v27
    %v37 = vsel %vm28, %v35, 0.0
    %38 = vadd.xlane.f32.xlu0 %v37
    %v39 = vpop.xlane.xlu0 %38
    %v40 = vsel %vm28, %v36, 0.0
    %41 = vadd.xlane.f32.xlu0 %v40
    %v42 = vpop.xlane.xlu0 %41
    %v43 = vmul.f32 %v31, 0.03125
    %v44 = vmul.f32 %v34, 0.03125
    %v45 = vmul.f32 %v39, 0.03125
    %v46 = vmul.f32 %v42, 0.03125
    %v47 = vmul.f32 %v43, %v43
    %v48 = vmul.f32 %v44, %v44
    %v49 = vsub.f32 %v45, %v47
    %v50 = vsub.f32 %v46, %v48
    %v51 = vadd.f32 %v49, 1e-05
    %v52 = vadd.f32 %v50, 1e-05
    %v53 = vrsqrt.pop %v51
    %v54 = vrsqrt.pop %v52
    %v55 = vsub.f32 %v26, %v43
    %v56 = vsub.f32 %v27, %v44
    %v57 = vmul.f32 %v55, %v53
    %v58 = vmul.f32 %v56, %v54
    %v59 = vld [vmem:[%s1] sm:$0x1]
    %v61 = vlaneseq
    %v62 = vshrl.u32 %v61, 7
    %v63 = vsub.s32 0, %v62
    %v64 = vrot.slane %v59, %v63
    %v66 = vmul.f32 %v57, %v64
    %v67 = vmul.f32 %v58, %v64
    %68 = vst.msk [vmem:[#allocation5] sm:$0xff] %vm28, %v66
    %69 = vst.msk [vmem:[#allocation5 + $0x8] sm:$0xff] %vm28, %v67
    // Predicated region
    $region14: #{layer_norm.1} parent=1 // pred_check
      _
    $region15: #{layer_norm.1} parent=1 // pred_check_branch
      %71 = sbr.rel (0) target = $region17
    $region16: #{layer_norm.1} parent=1 // pred_region
      %s73 = ssub.s32 256, 256
      %74 = vsyncadd [#allocation4], %s73
      %s75 = sshll.u32 [#allocation5], 4
      %s76 = int_to_ptr.vmem [resolvable:$true] %s75
      %81 = dma.vmem_to_hbm [thread:$0]  %s76, 256, %s2, [#allocation4], 128, 128, 8
    $region17: #{layer_norm.1} parent=1 // pred_fallthru
      _
    // Predicated region
    $region18: #{layer_norm.1} parent=1 // pred_check
      _
    $region19: #{layer_norm.1} parent=1 // pred_check_branch
      %83 = sbr.rel (0) target = $region21
    $region20: #{layer_norm.1} parent=1 // pred_region
      %84 = dma.done [#allocation4], 256
    $region21: #{layer_norm.1} parent=1 // pred_fallthru
      _
    %85 = vsyncpa [#allocation3], 1
    %86 = vsyncpa [#allocation4], 1

</llo_original>
